<compile_context>
chip_gen: v7x
topology: tpu7x:2x2x1
jax: 0.10.0
libtpu: 0.0.40
codegen_flags: <defaults>
</compile_context>

<pallas_src>
import functools

import jax
import jax.numpy as jnp
from jax.experimental import pallas as pl
from jax.experimental.pallas import tpu as pltpu

ImageChannels = 3
NumberOfKeypoints = 1
BackboneFeatures = 1000            # timm classifier output width
OutDim = NumberOfKeypoints * 2

_MAX_STATIC_GROUPS = 16            # fully unroll the lane-group fold up to this many groups


def _round_up(v, m):
    return (v + m - 1) // m * m


def _min_sublanes(itemsize):
    # Sub-32-bit dtypes pack along sublanes: f32 -> 8 rows, bf16 -> 16, int8 -> 32.
    return {4: 8, 2: 16, 1: 32}.get(itemsize, 8)


def _vmem_capacity_bytes():
    try:
        return pltpu.get_tpu_info().vmem_capacity_bytes   # 128 MiB v5e/v6e, 64 MiB v7x
    except Exception:  # pragma: no cover - conservative fallback
        return 64 << 20


def _pick_hw_tile(hw, padded_rows, itemsize, vmem_cap, requested=None):
    """Return (tile, padded_hw).

    tile == padded_hw == hw  => single-step path (no reduction grid axis).
    Otherwise tile is a multiple of 128 whose double-buffered, sublane-padded
    footprint fits the VMEM cap, and padded_hw is hw rounded up so tile | padded_hw.
    """
    if requested is not None:
        if requested == hw:
            return hw, hw
        if requested <= 0 or requested % 128 != 0:
            raise ValueError("hw_tile must equal H*W or be a positive multiple of 128")
        return requested, _round_up(hw, requested)
    cap_bytes = min(24 << 20, vmem_cap // 3)      # ~21 MiB on v7x, 24 MiB on v5e/v6e
    cap_lanes = max(128, (cap_bytes // (2 * padded_rows * itemsize)) // 128 * 128)
    if hw <= cap_lanes:
        return hw, hw                             # whole extent in one tile
    hw_pad = _round_up(hw, 128)
    tile = 128
    t = cap_lanes
    while t >= 128:                               # largest 128-multiple divisor <= cap
        if hw_pad % t == 0:
            tile = t
            break
        t -= 128
    return tile, hw_pad


def _accumulate_lane_groups(x_ref, acc_ref):
    """acc_ref[B*C, 128] += fold of x_ref[B*C, t_hw] over 128-lane groups (pure VPU)."""
    bc, t_hw = x_ref.shape
    n = t_hw // 128
    if n <= _MAX_STATIC_GROUPS:
        folded = x_ref[:, 0:128].astype(jnp.float32)
        for g in range(1, n):                                   # static unroll
            folded = folded + x_ref[:, g * 128:(g + 1) * 128].astype(jnp.float32)
        acc_ref[...] += folded
    else:
        def body(g, a):
            off = pl.multiple_of(g * 128, 128)
            return a + x_ref[:, pl.ds(off, 128)].astype(jnp.float32)
        acc_ref[...] += jax.lax.fori_loop(
            0, n, body, jnp.zeros(acc_ref.shape, jnp.float32), unroll=4)


def _head(row_sums, wp_ref, bp_ref, wft_ref, bf_ref, o_ref, *, batch, chans, inv_hw):
    """Backbone-head projection -> ReLU -> fc, run once for the whole batch.

    row_sums: (batch*chans, 1) f32 per-channel sums over H*W.
    wp_ref: (C, 1000), bp_ref: (1, 1000), wft_ref: (OutDim, 1000), bf_ref: (OutDim, 1)
    o_ref : (B, OutDim, 1)
    """
    pooled = row_sums * inv_hw                                    # (B*C, 1)
    for b in range(batch):                                        # static unroll; B is tiny
        pooled_b = pooled[b * chans:(b + 1) * chans, :]           # (C, 1)
        # Projection on the VPU: lane-broadcast + sublane reduce (K=C=3, no MXU).
        feat = jnp.sum(pooled_b * wp_ref[...], axis=0, keepdims=True) + bp_ref[...]
        feat = jnp.maximum(feat, 0.0)                             # ReLU, (1, 1000)
        # fc as OutDim lane reductions (no near-empty MXU matmul at B=2, N=2).
        y = jnp.sum(feat * wft_ref[...], axis=-1, keepdims=True) + bf_ref[...]
        o_ref[b] = y.astype(o_ref.dtype)                          # (OutDim, 1)


def _reduce_kernel(x_ref, wp_ref, bp_ref, wft_ref, bf_ref, o_ref, acc_ref,
                   *, batch, chans, inv_hw):
    """Multi-tile path: grid=(num_hw,) streams H*W; finalize on the last step."""
    k = pl.program_id(0)

    @pl.when(k == 0)
    def _():
        acc_ref[...] = jnp.zeros_like(acc_ref)

    _accumulate_lane_groups(x_ref, acc_ref)

    @pl.when(k == pl.num_programs(0) - 1)
    def _():
        row_sums = jnp.sum(acc_ref[...], axis=-1, keepdims=True)   # single XLU reduce
        _head(row_sums, wp_ref, bp_ref, wft_ref, bf_ref, o_ref,
              batch=batch, chans=chans, inv_hw=inv_hw)


def _single_step_kernel(x_ref, wp_ref, bp_ref, wft_ref, bf_ref, o_ref,
                        *, batch, chans, inv_hw):
    """Whole H*W in one VMEM tile: no grid, no scratch, no pl.when plumbing."""
    x = x_ref[...].astype(jnp.float32)                             # (B*C, HW)
    row_sums = jnp.sum(x, axis=-1, keepdims=True)
    _head(row_sums, wp_ref, bp_ref, wft_ref, bf_ref, o_ref,
          batch=batch, chans=chans, inv_hw=inv_hw)


def base_model_forward(x_nchw, wp, bp, w_fc, b_fc, *, hw_tile=None, x_compute_dtype=None):
    """x_nchw: (B, C, H, W) -> (B, NumberOfKeypoints*2) float32.

    wp: (C, 1000), bp: (1000,)       -- backbone-head stand-in parameters
    w_fc: (OutDim, 1000), b_fc: (OutDim,)  -- PyTorch nn.Linear layout
    x_compute_dtype: e.g. jnp.bfloat16 to halve HBM streaming traffic (v5e).
    """
    B, C, H, W = x_nchw.shape
    HW = H * W
    F = wp.shape[1]
    out_dim = w_fc.shape[0]
    BC = B * C

    x = x_nchw.reshape(BC, HW)                      # free reshape of contiguous NCHW
    if x_compute_dtype is not None and x.dtype != x_compute_dtype:
        x = x.astype(x_compute_dtype)
    itemsize = x.dtype.itemsize
    padded_rows = _round_up(BC, _min_sublanes(itemsize))

    vmem_cap = _vmem_capacity_bytes()
    t_hw, hw_pad = _pick_hw_tile(HW, padded_rows, itemsize, vmem_cap, hw_tile)
    if hw_pad != HW:                                # zero-pad lanes; sums unaffected
        x = jnp.pad(x, ((0, 0), (0, hw_pad - HW)))
    num_hw = hw_pad // t_hw

    bp2 = bp.reshape(1, F)
    bf2 = b_fc.reshape(out_dim, 1)

    # VMEM budget: sublane-padded (double-buffered) x tile + resident weights + scratch.
    f_pad = _round_up(F, 128)
    x_buf = (2 if num_hw > 1 else 1) * padded_rows * _round_up(t_hw, 128) * itemsize
    w_buf = 2 * 4 * (_round_up(C, 8) * f_pad + 8 * f_pad
                     + _round_up(out_dim, 8) * f_pad + _round_up(out_dim, 8) * 128)
    vmem_limit = x_buf + w_buf + padded_rows * 128 * 4 + (2 << 20)
    vmem_limit = int(min(max(vmem_limit, 16 << 20), (vmem_cap * 3) // 4))

    cost = pl.CostEstimate(
        flops=int(2 * BC * hw_pad + 2 * B * (C * F + F * out_dim)),
        transcendentals=0,
        bytes_accessed=int(x.size * itemsize
                           + 4 * (wp.size + bp.size + w_fc.size + b_fc.size
                                  + B * out_dim)))

    out_shape = jax.ShapeDtypeStruct((B, out_dim, 1), jnp.float32)

    if num_hw == 1:
        kernel = functools.partial(_single_step_kernel, batch=B, chans=C, inv_hw=1.0 / HW)
        out = pl.pallas_call(
            kernel,
            out_shape=out_shape,
            compiler_params=pltpu.CompilerParams(vmem_limit_bytes=vmem_limit),
            cost_estimate=cost,
        )(x, wp, bp2, w_fc, bf2)
    else:
        kernel = functools.partial(_reduce_kernel, batch=B, chans=C, inv_hw=1.0 / HW)
        out = pl.pallas_call(
            kernel,
            out_shape=out_shape,
            grid_spec=pltpu.PrefetchScalarGridSpec(
                num_scalar_prefetch=0,
                grid=(num_hw,),                                       # H*W reduction axis
                in_specs=[
                    pl.BlockSpec((BC, t_hw), lambda k: (0, k)),       # x tile (lane-dense)
                    pl.BlockSpec((C, F), lambda k: (0, 0)),           # wp (resident)
                    pl.BlockSpec((1, F), lambda k: (0, 0)),           # bp (resident)
                    pl.BlockSpec((out_dim, F), lambda k: (0, 0)),     # w_fc (resident)
                    pl.BlockSpec((out_dim, 1), lambda k: (0, 0)),     # b_fc (resident)
                ],
                out_specs=pl.BlockSpec((B, out_dim, 1), lambda k: (0, 0, 0)),
                scratch_shapes=[pltpu.VMEM((BC, 128), jnp.float32)],  # lane-wide accumulator
            ),
            compiler_params=pltpu.CompilerParams(
                dimension_semantics=("arbitrary",),
                vmem_limit_bytes=vmem_limit),
            cost_estimate=cost,
        )(x, wp, bp2, w_fc, bf2)

    return out.reshape(B, out_dim)


def reference_forward(x_nchw, wp, bp, w_fc, b_fc):
    """Pure-JAX reference for correctness check."""
    pooled = jnp.mean(x_nchw, axis=(2, 3))                 # (B, C)
    feat = jnp.maximum(pooled @ wp + bp, 0.0)              # (B, 1000)
    return feat @ w_fc.T + b_fc                            # (B, OutDim)


if __name__ == "__main__":
    key = jax.random.PRNGKey(0)
    k_x, k_wp, k_bp, k_wf, k_bf = jax.random.split(key, 5)

    B, C, H, W = 2, ImageChannels, 16, 16                  # H*W = 256
    x = jax.random.normal(k_x, (B, C, H, W), dtype=jnp.float32)

    # Deterministic synthetic parameters (shapes per module __init__).
    wp = jax.random.normal(k_wp, (C, BackboneFeatures), dtype=jnp.float32) * 0.05
    bp = jax.random.normal(k_bp, (BackboneFeatures,), dtype=jnp.float32) * 0.05
    w_fc = jax.random.normal(k_wf, (OutDim, BackboneFeatures), dtype=jnp.float32) * 0.05
    b_fc = jax.random.normal(k_bf, (OutDim,), dtype=jnp.float32) * 0.05

    y_ref = reference_forward(x, wp, bp, w_fc, b_fc)

    # 1) Force a 2-step H*W reduction to exercise accumulate/finalize.
    y = jax.block_until_ready(base_model_forward(x, wp, bp, w_fc, b_fc, hw_tile=128))
    assert y.shape == (B, OutDim), y.shape
    assert jnp.allclose(y, y_ref, atol=1e-4, rtol=1e-4), (y, y_ref)

    # 2) Auto-tiled path (whole H*W fits one tile -> single-step kernel).
    y2 = jax.block_until_ready(base_model_forward(x, wp, bp, w_fc, b_fc))
    assert jnp.allclose(y2, y_ref, atol=1e-4, rtol=1e-4), (y2, y_ref)

    # 3) bf16 streaming path (v5e HBM saving); compare against bf16-rounded reference.
    y_ref_bf = reference_forward(x.astype(jnp.bfloat16).astype(jnp.float32),
                                 wp, bp, w_fc, b_fc)
    y3 = jax.block_until_ready(
        base_model_forward(x, wp, bp, w_fc, b_fc, hw_tile=128,
                           x_compute_dtype=jnp.bfloat16))
    assert jnp.allclose(y3, y_ref_bf, atol=1e-3, rtol=1e-3), (y3, y_ref_bf)

    print("KERNEL_OK")
</pallas_src>

<mosaic_0001>
module attributes {stable_mosaic.version = 11 : i64} {
  func.func @_reduce_kernel(%arg0: i32, %arg1: memref<6x128xf32, #tpu.memory_space<vmem>>, %arg2: memref<3x1000xf32, #tpu.memory_space<vmem>>, %arg3: memref<1x1000xf32, #tpu.memory_space<vmem>>, %arg4: memref<2x1000xf32, #tpu.memory_space<vmem>>, %arg5: memref<2x1xf32, #tpu.memory_space<vmem>>, %arg6: memref<2x2x1xf32, #tpu.memory_space<vmem>>, %arg7: memref<6x128xf32, #tpu.memory_space<vmem>>) attributes {dimension_semantics = [#tpu.dimension_semantics<arbitrary>], iteration_bounds = array<i64: 2>, scalar_prefetch = 0 : i64, scratch_operands = 1 : i64, tpu.core_type = #tpu.core_type<tc>, window_params = [{transform_indices = @transform_0, window_bounds = array<i64: 6, 128>}, {pipeline_mode = #tpu.pipeline_mode<synchronous>, transform_indices = @transform_1, window_bounds = array<i64: 3, 1000>}, {pipeline_mode = #tpu.pipeline_mode<synchronous>, transform_indices = @transform_2, window_bounds = array<i64: 1, 1000>}, {pipeline_mode = #tpu.pipeline_mode<synchronous>, transform_indices = @transform_3, window_bounds = array<i64: 2, 1000>}, {pipeline_mode = #tpu.pipeline_mode<synchronous>, transform_indices = @transform_4, window_bounds = array<i64: 2, 1>}, {pipeline_mode = #tpu.pipeline_mode<synchronous>, transform_indices = @transform_5, window_bounds = array<i64: 2, 2, 1>}]} {
    %c0_i32 = arith.constant 0 : i32
    %0 = arith.cmpi eq, %arg0, %c0_i32 : i32
    %1 = arith.extui %0 : i1 to i32
    %c0_i32_0 = arith.constant 0 : i32
    %2 = arith.cmpi ne, %1, %c0_i32_0 : i32
    scf.if %2 {
      %cst = arith.constant 0.000000e+00 : f32
      %10 = vector.broadcast %cst : f32 to vector<6x128xf32>
      %c0_7 = arith.constant 0 : index
      %c0_8 = arith.constant 0 : index
      %11 = vector.load %arg7[%c0_7, %c0_8] : memref<6x128xf32, #tpu.memory_space<vmem>>, vector<6x128xf32>
      tpu.vector_store %arg7[%c0_7, %c0_8], %10 {strides = array<i32>} : memref<6x128xf32, #tpu.memory_space<vmem>>, vector<6x128xf32>,
    } else {
    }
    %c0 = arith.constant 0 : index
    %c0_1 = arith.constant 0 : index
    %3 = vector.load %arg1[%c0, %c0_1] : memref<6x128xf32, #tpu.memory_space<vmem>>, vector<6x128xf32>
    %c0_2 = arith.constant 0 : index
    %c0_3 = arith.constant 0 : index
    %4 = vector.load %arg7[%c0_2, %c0_3] : memref<6x128xf32, #tpu.memory_space<vmem>>, vector<6x128xf32>
    %5 = arith.addf %4, %3 : vector<6x128xf32>
    %c0_4 = arith.constant 0 : index
    %c0_5 = arith.constant 0 : index
    %6 = vector.load %arg7[%c0_4, %c0_5] : memref<6x128xf32, #tpu.memory_space<vmem>>, vector<6x128xf32>
    tpu.vector_store %arg7[%c0_4, %c0_5], %5 {strides = array<i32>} : memref<6x128xf32, #tpu.memory_space<vmem>>, vector<6x128xf32>,
    %c1_i32 = arith.constant 1 : i32
    %7 = arith.cmpi eq, %arg0, %c1_i32 : i32
    %8 = arith.extui %7 : i1 to i32
    %c0_i32_6 = arith.constant 0 : i32
    %9 = arith.cmpi ne, %8, %c0_i32_6 : i32
    scf.if %9 {
      %c0_7 = arith.constant 0 : index
      %c0_8 = arith.constant 0 : index
      %10 = vector.load %arg7[%c0_7, %c0_8] : memref<6x128xf32, #tpu.memory_space<vmem>>, vector<6x128xf32>
      %cst = arith.constant dense<0.000000e+00> : vector<6xf32>
      %11 = vector.multi_reduction <add>, %10, %cst [1] : vector<6x128xf32> to vector<6xf32>
      %12 = vector.shape_cast %11 : vector<6xf32> to vector<6x1xf32>
      %cst_9 = arith.constant 3.906250e-03 : f32
      %13 = vector.broadcast %cst_9 : f32 to vector<6x1xf32>
      %14 = arith.mulf %12, %13 : vector<6x1xf32>
      %15 = vector.extract_strided_slice %14 {offsets = [0, 0], sizes = [3, 1], strides = [1, 1]} : vector<6x1xf32> to vector<3x1xf32>
      %c0_10 = arith.constant 0 : index
      %c0_11 = arith.constant 0 : index
      %16 = vector.load %arg2[%c0_10, %c0_11] : memref<3x1000xf32, #tpu.memory_space<vmem>>, vector<3x1000xf32>
      %17 = vector.broadcast %15 : vector<3x1xf32> to vector<3x1000xf32>
      %18 = arith.mulf %17, %16 : vector<3x1000xf32>
      %cst_12 = arith.constant dense<0.000000e+00> : vector<1000xf32>
      %19 = vector.multi_reduction <add>, %18, %cst_12 [0] : vector<3x1000xf32> to vector<1000xf32>
      %20 = vector.shape_cast %19 : vector<1000xf32> to vector<1x1000xf32>
      %c0_13 = arith.constant 0 : index
      %c0_14 = arith.constant 0 : index
      %21 = vector.load %arg3[%c0_13, %c0_14] : memref<1x1000xf32, #tpu.memory_space<vmem>>, vector<1x1000xf32>
      %22 = arith.addf %20, %21 : vector<1x1000xf32>
      %cst_15 = arith.constant 0.000000e+00 : f32
      %23 = vector.broadcast %cst_15 : f32 to vector<1x1000xf32>
      %24 = arith.maximumf %22, %23 : vector<1x1000xf32>
      %c0_16 = arith.constant 0 : index
      %c0_17 = arith.constant 0 : index
      %25 = vector.load %arg4[%c0_16, %c0_17] : memref<2x1000xf32, #tpu.memory_space<vmem>>, vector<2x1000xf32>
      %26 = vector.broadcast %24 : vector<1x1000xf32> to vector<2x1000xf32>
      %27 = arith.mulf %26, %25 : vector<2x1000xf32>
      %cst_18 = arith.constant dense<0.000000e+00> : vector<2xf32>
      %28 = vector.multi_reduction <add>, %27, %cst_18 [1] : vector<2x1000xf32> to vector<2xf32>
      %29 = vector.shape_cast %28 : vector<2xf32> to vector<2x1xf32>
      %c0_19 = arith.constant 0 : index
      %c0_20 = arith.constant 0 : index
      %30 = vector.load %arg5[%c0_19, %c0_20] : memref<2x1xf32, #tpu.memory_space<vmem>>, vector<2x1xf32>
      %31 = arith.addf %29, %30 : vector<2x1xf32>
      %c0_21 = arith.constant 0 : index
      %c0_22 = arith.constant 0 : index
      %c0_23 = arith.constant 0 : index
      %32 = vector.load %arg6[%c0_21, %c0_22, %c0_23] : memref<2x2x1xf32, #tpu.memory_space<vmem>>, vector<1x2x1xf32>
      %33 = vector.shape_cast %32 : vector<1x2x1xf32> to vector<2x1xf32>
      %34 = vector.shape_cast %31 : vector<2x1xf32> to vector<1x2x1xf32>
      tpu.vector_store %arg6[%c0_21, %c0_22, %c0_23], %34 {strides = array<i32>} : memref<2x2x1xf32, #tpu.memory_space<vmem>>, vector<1x2x1xf32>,
      %35 = vector.extract_strided_slice %14 {offsets = [3, 0], sizes = [3, 1], strides = [1, 1]} : vector<6x1xf32> to vector<3x1xf32>
      %c0_24 = arith.constant 0 : index
      %c0_25 = arith.constant 0 : index
      %36 = vector.load %arg2[%c0_24, %c0_25] : memref<3x1000xf32, #tpu.memory_space<vmem>>, vector<3x1000xf32>
      %37 = vector.broadcast %35 : vector<3x1xf32> to vector<3x1000xf32>
      %38 = arith.mulf %37, %36 : vector<3x1000xf32>
      %cst_26 = arith.constant dense<0.000000e+00> : vector<1000xf32>
      %39 = vector.multi_reduction <add>, %38, %cst_26 [0] : vector<3x1000xf32> to vector<1000xf32>
      %40 = vector.shape_cast %39 : vector<1000xf32> to vector<1x1000xf32>
      %c0_27 = arith.constant 0 : index
      %c0_28 = arith.constant 0 : index
      %41 = vector.load %arg3[%c0_27, %c0_28] : memref<1x1000xf32, #tpu.memory_space<vmem>>, vector<1x1000xf32>
      %42 = arith.addf %40, %41 : vector<1x1000xf32>
      %cst_29 = arith.constant 0.000000e+00 : f32
      %43 = vector.broadcast %cst_29 : f32 to vector<1x1000xf32>
      %44 = arith.maximumf %42, %43 : vector<1x1000xf32>
      %c0_30 = arith.constant 0 : index
      %c0_31 = arith.constant 0 : index
      %45 = vector.load %arg4[%c0_30, %c0_31] : memref<2x1000xf32, #tpu.memory_space<vmem>>, vector<2x1000xf32>
      %46 = vector.broadcast %44 : vector<1x1000xf32> to vector<2x1000xf32>
      %47 = arith.mulf %46, %45 : vector<2x1000xf32>
      %cst_32 = arith.constant dense<0.000000e+00> : vector<2xf32>
      %48 = vector.multi_reduction <add>, %47, %cst_32 [1] : vector<2x1000xf32> to vector<2xf32>
      %49 = vector.shape_cast %48 : vector<2xf32> to vector<2x1xf32>
      %c0_33 = arith.constant 0 : index
      %c0_34 = arith.constant 0 : index
      %50 = vector.load %arg5[%c0_33, %c0_34] : memref<2x1xf32, #tpu.memory_space<vmem>>, vector<2x1xf32>
      %51 = arith.addf %49, %50 : vector<2x1xf32>
      %c1 = arith.constant 1 : index
      %c0_35 = arith.constant 0 : index
      %c0_36 = arith.constant 0 : index
      %52 = vector.load %arg6[%c1, %c0_35, %c0_36] : memref<2x2x1xf32, #tpu.memory_space<vmem>>, vector<1x2x1xf32>
      %53 = vector.shape_cast %52 : vector<1x2x1xf32> to vector<2x1xf32>
      %54 = vector.shape_cast %51 : vector<2x1xf32> to vector<1x2x1xf32>
      tpu.vector_store %arg6[%c1, %c0_35, %c0_36], %54 {strides = array<i32>} : memref<2x2x1xf32, #tpu.memory_space<vmem>>, vector<1x2x1xf32>,
    } else {
    }
    return
  }
  func.func @transform_0(%arg0: i32) -> (i32, i32) {
    %c0_i32 = arith.constant 0 : i32
    %c0_i32_0 = arith.constant 0 : i32
    return %c0_i32, %arg0 : i32, i32
  }
  func.func @transform_1(%arg0: i32) -> (i32, i32) {
    %c0_i32 = arith.constant 0 : i32
    %c0_i32_0 = arith.constant 0 : i32
    %c0_i32_1 = arith.constant 0 : i32
    return %c0_i32, %c0_i32_0 : i32, i32
  }
  func.func @transform_2(%arg0: i32) -> (i32, i32) {
    %c0_i32 = arith.constant 0 : i32
    %c0_i32_0 = arith.constant 0 : i32
    %c0_i32_1 = arith.constant 0 : i32
    return %c0_i32, %c0_i32_0 : i32, i32
  }
  func.func @transform_3(%arg0: i32) -> (i32, i32) {
    %c0_i32 = arith.constant 0 : i32
    %c0_i32_0 = arith.constant 0 : i32
    %c0_i32_1 = arith.constant 0 : i32
    return %c0_i32, %c0_i32_0 : i32, i32
  }
  func.func @transform_4(%arg0: i32) -> (i32, i32) {
    %c0_i32 = arith.constant 0 : i32
    %c0_i32_0 = arith.constant 0 : i32
    %c0_i32_1 = arith.constant 0 : i32
    return %c0_i32, %c0_i32_0 : i32, i32
  }
  func.func @transform_5(%arg0: i32) -> (i32, i32, i32) {
    %c0_i32 = arith.constant 0 : i32
    %c0_i32_0 = arith.constant 0 : i32
    %c0_i32_1 = arith.constant 0 : i32
    %c0_i32_2 = arith.constant 0 : i32
    return %c0_i32, %c0_i32_0, %c0_i32_1 : i32, i32, i32
  }
}

</mosaic_0001>

<llo_original>
// kernel: tpu_custom_call.1
$region0: #{tpu_custom_call.1}
  #allocation0 [shape = 'u32[]', space=smem, size = 0x4, offset = 0x4, fixed_abs, tag = 'smem constant byte address 0x4 - core index']
  #allocation1 [shape = 'u32[144,128]{1,0:T(1,128)}', space=vmem, size = 0x12000, scoped, tag = 'internal scratch']
  #allocation2 [shape = 'f32[6,128]{1,0:T(8,128)}', space=vmem, size = 0x1000, scoped, tag = 'scratch operand']
  %s0 = inlined_call_operand.hbm [shape: f32[6,256], index: 0, kind: input, shape index: {}]
  %s1 = inlined_call_operand.hbm [shape: f32[3,1000], index: 1, kind: input, shape index: {}]
  %s2 = inlined_call_operand.vmem [shape: f32[1,1000], index: 2, kind: input, shape index: {}]
  %s3 = inlined_call_operand.hbm [shape: f32[2,1000], index: 3, kind: input, shape index: {}]
  %s4 = inlined_call_operand.vmem [shape: f32[2,1], index: 4, kind: input, shape index: {}]
  %s5 = inlined_call_operand.vmem [shape: f32[2,2,1], index: 5, kind: output, shape index: {}]
  %s6 = sld [smem:[#allocation0]]
  $region73: #{tpu_custom_call.1} parent=0
    _
  %s8 = ssub.s32 1, %s6
  %s9 = scalar_select 0, %s8, %s6
  $region1: #{tpu_custom_call.1} parent=0
    #allocation3 [shape = 'u8[8192]{0}', space=vmem, size = 0x2000, scoped, tag = 'input window, operand 0']
    #allocation4 [shape = 's32[2]{0}', space=sflag, size = 0x8, scoped, tag = 'scoped memory for tpu_custom_call.1']
    #allocation5 [shape = 'u8[16384]{0}', space=vmem, size = 0x4000, scoped, tag = 'input window, operand 1, single buffered']
    #allocation6 [shape = 's32[1]{0}', space=sflag, size = 0x4, scoped, tag = 'scoped memory for tpu_custom_call.1']
    #allocation7 [shape = 'u8[8192]{0}', space=vmem, size = 0x2000, scoped, tag = 'input window, operand 3, single buffered']
    %10 = vsyncpa [#allocation4], 0
    %s11 = scalar_lea.sflag [#allocation4], 1
    %12 = vsyncpa %s11, 0
    %13 = vsyncpa [#allocation6], 0
    loop: start=0, step=1, limit=4
    $region2: #{tpu_custom_call.1} parent=1 // loop_pre_header
      _
    $region3: #{tpu_custom_call.1} parent=1 // loop_header
      %s15 = sphi 0, %s19
      %p16 = scmp.ge.s32.totalorder %s15, 4
      %s25 = sphi 0, %s27
      %s28 = sphi 0, %s25
      %s29 = sphi 0, %s28
      %s45 = sphi 0, %s29
      %s49 = sphi 0, %s49
      %s51 = sphi 0, %s49
      %s52 = sphi 0, %s51
      %s66 = sphi 0, %s52
      %s70 = sphi 0, %s70
      %s72 = sphi 0, %s70
      %s73 = sphi 0, %s72
      %s87 = sphi 0, %s73
      %s91 = sphi 0, %s91
      %s93 = sphi 0, %s91
      %s94 = sphi 0, %s93
      %s108 = sphi 0, %s94
      %s112 = sphi 0, %s112
      %s114 = sphi 0, %s112
      %s115 = sphi 0, %s114
      %s129 = sphi 0, %s115
      %s133 = sphi 0, %s133
      %s135 = sphi 0, %s133
      %s136 = sphi 0, %s135
      %s150 = sphi 0, %s136
    $region4: #{tpu_custom_call.1} parent=1 // loop_header_branch
      %18 = sbr.rel (%p16) target = $region8
    $region5: #{tpu_custom_call.1} parent=1 // loop_body
      %s20 = ssub.s32 %s15, 1
      %s21 = ssub.s32 %s15, 2
      %s22 = sadd.s32 %s15, 1
      %s23 = ssub.s32 %s15, %s22
      %p24 = scmp.eq.s32.totalorder %s23, 0
      %s26 = sadd.s32 %s25, 1
      %s27 = scalar_select %p24, %s25, %s26
      %p30 = pneg %p24
      %p31 = scmp.eq.s32.totalorder %s15, 1
      %p32 = por %p30, %p31
      %p33 = scmp.ne.s32.totalorder %s25, %s28
      %p34 = scmp.eq.s32.totalorder %s15, 0
      %p35 = por %p33, %p34
      %p36 = scmp.ne.s32.totalorder %s25, %s28
      %p37 = scmp.eq.s32.totalorder %s20, 1
      %p38 = por %p36, %p37
      %p39 = scmp.ne.s32.totalorder %s28, %s29
      %p40 = scmp.eq.s32.totalorder %s20, 0
      %p41 = por %p39, %p40
      %p42 = scmp.ne.s32.totalorder %s28, %s29
      %p43 = scmp.eq.s32.totalorder %s21, 1
      %p44 = por %p42, %p43
      %p46 = scmp.ne.s32.totalorder %s29, %s45
      %p47 = scmp.eq.s32.totalorder %s21, 0
      %p48 = por %p46, %p47
      %s50 = sadd.s32 %s49, 1
      %p53 = scmp.eq.s32.totalorder %s15, 1
      %p54 = scmp.ne.s32.totalorder %s49, %s51
      %p55 = scmp.eq.s32.totalorder %s15, 0
      %p56 = por %p54, %p55
      %p57 = scmp.ne.s32.totalorder %s49, %s51
      %p58 = scmp.eq.s32.totalorder %s20, 1
      %p59 = por %p57, %p58
      %p60 = scmp.ne.s32.totalorder %s51, %s52
      %p61 = scmp.eq.s32.totalorder %s20, 0
      %p62 = por %p60, %p61
      %p63 = scmp.ne.s32.totalorder %s51, %s52
      %p64 = scmp.eq.s32.totalorder %s21, 1
      %p65 = por %p63, %p64
      %p67 = scmp.ne.s32.totalorder %s52, %s66
      %p68 = scmp.eq.s32.totalorder %s21, 0
      %p69 = por %p67, %p68
      %s71 = sadd.s32 %s70, 1
      %p74 = scmp.eq.s32.totalorder %s15, 1
      %p75 = scmp.ne.s32.totalorder %s70, %s72
      %p76 = scmp.eq.s32.totalorder %s15, 0
      %p77 = por %p75, %p76
      %p78 = scmp.ne.s32.totalorder %s70, %s72
      %p79 = scmp.eq.s32.totalorder %s20, 1
      %p80 = por %p78, %p79
      %p81 = scmp.ne.s32.totalorder %s72, %s73
      %p82 = scmp.eq.s32.totalorder %s20, 0
      %p83 = por %p81, %p82
      %p84 = scmp.ne.s32.totalorder %s72, %s73
      %p85 = scmp.eq.s32.totalorder %s21, 1
      %p86 = por %p84, %p85
      %p88 = scmp.ne.s32.totalorder %s73, %s87
      %p89 = scmp.eq.s32.totalorder %s21, 0
      %p90 = por %p88, %p89
      %s92 = sadd.s32 %s91, 1
      %p95 = scmp.eq.s32.totalorder %s15, 1
      %p96 = scmp.ne.s32.totalorder %s91, %s93
      %p97 = scmp.eq.s32.totalorder %s15, 0
      %p98 = por %p96, %p97
      %p99 = scmp.ne.s32.totalorder %s91, %s93
      %p100 = scmp.eq.s32.totalorder %s20, 1
      %p101 = por %p99, %p100
      %p102 = scmp.ne.s32.totalorder %s93, %s94
      %p103 = scmp.eq.s32.totalorder %s20, 0
      %p104 = por %p102, %p103
      %p105 = scmp.ne.s32.totalorder %s93, %s94
      %p106 = scmp.eq.s32.totalorder %s21, 1
      %p107 = por %p105, %p106
      %p109 = scmp.ne.s32.totalorder %s94, %s108
      %p110 = scmp.eq.s32.totalorder %s21, 0
      %p111 = por %p109, %p110
      %s113 = sadd.s32 %s112, 1
      %p116 = scmp.eq.s32.totalorder %s15, 1
      %p117 = scmp.ne.s32.totalorder %s112, %s114
      %p118 = scmp.eq.s32.totalorder %s15, 0
      %p119 = por %p117, %p118
      %p120 = scmp.ne.s32.totalorder %s112, %s114
      %p121 = scmp.eq.s32.totalorder %s20, 1
      %p122 = por %p120, %p121
      %p123 = scmp.ne.s32.totalorder %s114, %s115
      %p124 = scmp.eq.s32.totalorder %s20, 0
      %p125 = por %p123, %p124
      %p126 = scmp.ne.s32.totalorder %s114, %s115
      %p127 = scmp.eq.s32.totalorder %s21, 1
      %p128 = por %p126, %p127
      %p130 = scmp.ne.s32.totalorder %s115, %s129
      %p131 = scmp.eq.s32.totalorder %s21, 0
      %p132 = por %p130, %p131
      %s134 = sadd.s32 %s133, 1
      %p137 = scmp.eq.s32.totalorder %s15, 1
      %p138 = scmp.ne.s32.totalorder %s133, %s135
      %p139 = scmp.eq.s32.totalorder %s15, 0
      %p140 = por %p138, %p139
      %p141 = scmp.ne.s32.totalorder %s133, %s135
      %p142 = scmp.eq.s32.totalorder %s20, 1
      %p143 = por %p141, %p142
      %p144 = scmp.ne.s32.totalorder %s135, %s136
      %p145 = scmp.eq.s32.totalorder %s20, 0
      %p146 = por %p144, %p145
      %p147 = scmp.ne.s32.totalorder %s135, %s136
      %p148 = scmp.eq.s32.totalorder %s21, 1
      %p149 = por %p147, %p148
      %p151 = scmp.ne.s32.totalorder %s136, %s150
      %p152 = scmp.eq.s32.totalorder %s21, 0
      %p153 = por %p151, %p152
      %p154 = scmp.le.s32.totalorder 1, %s15
      %p155 = scmp.lt.s32.totalorder %s15, 3
      %p156 = pnand %p154, %p155
      %p157 = pneg %p156
      // Predicated region
      $region9: #{tpu_custom_call.1} parent=5 // pred_check
        _
      $region10: #{tpu_custom_call.1} parent=5 // pred_check_branch
        %159 = sbr.rel (%p156) target = $region12
      $region11: #{tpu_custom_call.1} parent=5 // pred_region
        %s160 = ssub.s32 %s15, 1
        // Predicated region
        $region13: #{tpu_custom_call.1} parent=11 // pred_check
          %p161 = pneg %p62
        $region14: #{tpu_custom_call.1} parent=11 // pred_check_branch
          %163 = sbr.rel (%p161) target = $region16
        $region15: #{tpu_custom_call.1} parent=11 // pred_region
          %s165 = ssub.s32 512, 512
          %166 = vsyncadd [#allocation6], %s165
          %s168 = sshll.u32 [#allocation5], 4
          %s169 = int_to_ptr.vmem [resolvable:$true] %s168
          %171 = dma.hbm_to_vmem [thread:$0]  %s1, 512, %s169, [#allocation6]
        $region16: #{tpu_custom_call.1} parent=11 // pred_fallthru
          _
        // Predicated region
        $region17: #{tpu_custom_call.1} parent=11 // pred_check
          %p172 = pneg %p83
        $region18: #{tpu_custom_call.1} parent=11 // pred_check_branch
          %174 = sbr.rel (%p172) target = $region20
        $region19: #{tpu_custom_call.1} parent=11 // pred_region
          _
        $region20: #{tpu_custom_call.1} parent=11 // pred_fallthru
          _
        // Predicated region
        $region21: #{tpu_custom_call.1} parent=11 // pred_check
          %p175 = pneg %p104
        $region22: #{tpu_custom_call.1} parent=11 // pred_check_branch
          %177 = sbr.rel (%p175) target = $region24
        $region23: #{tpu_custom_call.1} parent=11 // pred_region
          %s179 = ssub.s32 256, 256
          %180 = vsyncadd [#allocation6], %s179
          %s182 = sshll.u32 [#allocation7], 4
          %s183 = int_to_ptr.vmem [resolvable:$true] %s182
          %185 = dma.hbm_to_vmem [thread:$0]  %s3, 256, %s183, [#allocation6]
        $region24: #{tpu_custom_call.1} parent=11 // pred_fallthru
          _
        // Predicated region
        $region25: #{tpu_custom_call.1} parent=11 // pred_check
          %p186 = pneg %p125
        $region26: #{tpu_custom_call.1} parent=11 // pred_check_branch
          %188 = sbr.rel (%p186) target = $region28
        $region27: #{tpu_custom_call.1} parent=11 // pred_region
          _
        $region28: #{tpu_custom_call.1} parent=11 // pred_fallthru
          _
      $region12: #{tpu_custom_call.1} parent=5 // pred_fallthru
        _
      %p189 = scmp.lt.s32.totalorder %s15, 2
      // Predicated region
      $region29: #{tpu_custom_call.1} parent=5 // pred_check
        %p190 = pneg %p189
      $region30: #{tpu_custom_call.1} parent=5 // pred_check_branch
        %192 = sbr.rel (%p190) target = $region32
      $region31: #{tpu_custom_call.1} parent=5 // pred_region
        // Predicated region
        $region33: #{tpu_custom_call.1} parent=31 // pred_check
          %p193 = pneg %p35
        $region34: #{tpu_custom_call.1} parent=31 // pred_check_branch
          %195 = sbr.rel (%p193) target = $region36
        $region35: #{tpu_custom_call.1} parent=31 // pred_region
          %s196 = sand.u32 %s25, 1
          %s197 = scalar_lea.sflag [#allocation4], %s196
          %s198 = sand.u32 %s25, 1
          %s199 = smul.addr %s198, 8
          %s200 = scalar_lea.vmem [#allocation3], %s199
          %s202 = ssub.s32 128, 128
          %203 = vsyncadd %s197, %s202
          %s204 = smul.addr %s15, 128
          %s205 = scalar_lea.hbm %s0, %s204
          %s207 = sshll.u32 %s200, 4
          %s208 = int_to_ptr.vmem [resolvable:$true] %s207
          %210 = dma.hbm_to_vmem [thread:$0]  %s205, 128, %s208, %s197
        $region36: #{tpu_custom_call.1} parent=31 // pred_fallthru
          _
      $region32: #{tpu_custom_call.1} parent=5 // pred_fallthru
        _
      %p211 = scmp.le.s32.totalorder 1, %s15
      %p212 = scmp.lt.s32.totalorder %s15, 3
      %p213 = pnand %p211, %p212
      %p214 = pneg %p213
      // Predicated region
      $region37: #{tpu_custom_call.1} parent=5 // pred_check
        _
      $region38: #{tpu_custom_call.1} parent=5 // pred_check_branch
        %216 = sbr.rel (%p213) target = $region40
      $region39: #{tpu_custom_call.1} parent=5 // pred_region
        %s217 = ssub.s32 %s15, 1
        %s218 = sand.u32 %s28, 1
        %s219 = scalar_lea.sflag [#allocation4], %s218
        %s220 = sand.u32 %s28, 1
        %s221 = smul.addr %s220, 8
        %s222 = scalar_lea.vmem [#allocation3], %s221
        // Predicated region
        $region41: #{tpu_custom_call.1} parent=39 // pred_check
          %p223 = pneg %p41
        $region42: #{tpu_custom_call.1} parent=39 // pred_check_branch
          %225 = sbr.rel (%p223) target = $region44
        $region43: #{tpu_custom_call.1} parent=39 // pred_region
          %226 = dma.done %s219, 128
        $region44: #{tpu_custom_call.1} parent=39 // pred_fallthru
          _
        // Predicated region
        $region45: #{tpu_custom_call.1} parent=39 // pred_check
          %p227 = pneg %p62
        $region46: #{tpu_custom_call.1} parent=39 // pred_check_branch
          %229 = sbr.rel (%p227) target = $region48
        $region47: #{tpu_custom_call.1} parent=39 // pred_region
          %230 = dma.done [#allocation6], 512
        $region48: #{tpu_custom_call.1} parent=39 // pred_fallthru
          _
        // Predicated region
        $region49: #{tpu_custom_call.1} parent=39 // pred_check
          %p231 = pneg %p104
        $region50: #{tpu_custom_call.1} parent=39 // pred_check_branch
          %233 = sbr.rel (%p231) target = $region52
        $region51: #{tpu_custom_call.1} parent=39 // pred_region
          %234 = dma.done [#allocation6], 256
        $region52: #{tpu_custom_call.1} parent=39 // pred_fallthru
          _
        %s235 = sand.u32 %s28, 1
        %s236 = scalar_lea.sflag [#allocation4], %s235
        %s237 = sand.u32 %s28, 1
        %s238 = smul.addr %s237, 8
        %s239 = scalar_lea.vmem [#allocation3], %s238
        %p240 = pneg %p41
        %p241 = pneg %p38
        %p242 = pneg %p62
        %p243 = pneg %p59
        %p244 = pneg %p83
        %p245 = pneg %p80
        %p246 = pneg %p104
        %p247 = pneg %p101
        %p248 = pneg %p125
        %p249 = pneg %p122
        %p250 = pneg %p146
        %p251 = pneg %p143
        %p252 = scmp.eq.s32.totalorder %s20, 0
        // Predicated region
        $region53: #{tpu_custom_call.1} parent=39 // pred_check
          %p253 = pneg %p252
        $region54: #{tpu_custom_call.1} parent=39 // pred_check_branch
          %255 = sbr.rel (%p253) target = $region56
        $region55: #{tpu_custom_call.1} parent=39 // pred_region
          %256 = vst [vmem:[#allocation2] sm:$0x3f] 0.0
        $region56: #{tpu_custom_call.1} parent=39 // pred_fallthru
          _
        %v257 = vld [vmem:[%s222] sm:$0x3f]
        %v258 = vld [vmem:[#allocation2] sm:$0x3f]
        %v259 = vadd.f32 %v258, %v257
        %260 = vst [vmem:[#allocation2] sm:$0x3f] %v259
        %p261 = scmp.eq.s32.totalorder %s20, 1
        // Predicated region
        $region57: #{tpu_custom_call.1} parent=39 // pred_check
          %p262 = pneg %p261
        $region58: #{tpu_custom_call.1} parent=39 // pred_check_branch
          %264 = sbr.rel (%p262) target = $region60
        $region59: #{tpu_custom_call.1} parent=39 // pred_region
          %v265 = vld [vmem:[#allocation2] sm:$0x3f]
          %vm266 = vcmask 1045504
          %v267 = vsel %vm266, %v265, 0.0
          %268 = vadd.xlane.f32.xlu0 %v267
          %v269 = vpop.xlane.xlu0 %268
          %v270 = vmul.f32 %v269, 0.00390625
          %v271 = vld [vmem:[#allocation5] sm:$0x77]
          %v272 = vld [vmem:[#allocation5 + $0x8] sm:$0x77]
          %v273 = vld [vmem:[#allocation5 + $0x10] sm:$0x77]
          %v274 = vld [vmem:[#allocation5 + $0x18] sm:$0x77]
          %v279 = vcombine.high %v271, %v271
          %v280 = vcombine.high %v272, %v272
          %v281 = vcombine.high %v273, %v273
          %v282 = vcombine.high %v274, %v274
          %v287 = vmul.f32 %v270, %v271
          %v288 = vmul.f32 %v270, %v279
          %v289 = vmul.f32 %v270, %v272
          %v290 = vmul.f32 %v270, %v280
          %v291 = vmul.f32 %v270, %v273
          %v292 = vmul.f32 %v270, %v281
          %v293 = vmul.f32 %v270, %v274
          %v294 = vmul.f32 %v270, %v282
          %vm295 = vcmask 1042432
          %v296 = vsel %vm295, %v287, 0.0
          %v297 = vrot.slane %v296, 4
          %v298 = vadd.f32 %v296, %v297
          %v299 = vrot.slane %v298, 2
          %v300 = vadd.f32 %v298, %v299
          %v301 = vrot.slane %v300, 1
          %v302 = vadd.f32 %v300, %v301
          %v303 = vsel %vm295, %v288, 0.0
          %v304 = vrot.slane %v303, 4
          %v305 = vadd.f32 %v303, %v304
          %v306 = vrot.slane %v305, 2
          %v307 = vadd.f32 %v305, %v306
          %v308 = vrot.slane %v307, 1
          %v309 = vadd.f32 %v307, %v308
          %v310 = vsel %vm295, %v289, 0.0
          %v311 = vrot.slane %v310, 4
          %v312 = vadd.f32 %v310, %v311
          %v313 = vrot.slane %v312, 2
          %v314 = vadd.f32 %v312, %v313
          %v315 = vrot.slane %v314, 1
          %v316 = vadd.f32 %v314, %v315
          %v317 = vsel %vm295, %v290, 0.0
          %v318 = vrot.slane %v317, 4
          %v319 = vadd.f32 %v317, %v318
          %v320 = vrot.slane %v319, 2
          %v321 = vadd.f32 %v319, %v320
          %v322 = vrot.slane %v321, 1
          %v323 = vadd.f32 %v321, %v322
          %v324 = vsel %vm295, %v291, 0.0
          %v325 = vrot.slane %v324, 4
          %v326 = vadd.f32 %v324, %v325
          %v327 = vrot.slane %v326, 2
          %v328 = vadd.f32 %v326, %v327
          %v329 = vrot.slane %v328, 1
          %v330 = vadd.f32 %v328, %v329
          %v331 = vsel %vm295, %v292, 0.0
          %v332 = vrot.slane %v331, 4
          %v333 = vadd.f32 %v331, %v332
          %v334 = vrot.slane %v333, 2
          %v335 = vadd.f32 %v333, %v334
          %v336 = vrot.slane %v335, 1
          %v337 = vadd.f32 %v335, %v336
          %v338 = vsel %vm295, %v293, 0.0
          %v339 = vrot.slane %v338, 4
          %v340 = vadd.f32 %v338, %v339
          %v341 = vrot.slane %v340, 2
          %v342 = vadd.f32 %v340, %v341
          %v343 = vrot.slane %v342, 1
          %v344 = vadd.f32 %v342, %v343
          %vm345 = vcmask 845824
          %v346 = vsel %vm345, %v294, 0.0
          %v347 = vrot.slane %v346, 4
          %v348 = vadd.f32 %v346, %v347
          %v349 = vrot.slane %v348, 2
          %v350 = vadd.f32 %v348, %v349
          %v351 = vrot.slane %v350, 1
          %v352 = vadd.f32 %v350, %v351
          %v353 = vld [vmem:[%s2] sm:$0xff]
          %v355 = vlaneseq
          %v356 = vshrl.u32 %v355, 7
          %v357 = vsub.s32 0, %v356
          %v358 = vrot.slane %v353, %v357
          %v359 = vlaneseq
          %v360 = vshrl.u32 %v359, 7
          %v361 = vsub.s32 1, %v360
          %v362 = vrot.slane %v353, %v361
          %v363 = vlaneseq
          %v364 = vshrl.u32 %v363, 7
          %v365 = vsub.s32 2, %v364
          %v366 = vrot.slane %v353, %v365
          %v367 = vlaneseq
          %v368 = vshrl.u32 %v367, 7
          %v369 = vsub.s32 3, %v368
          %v370 = vrot.slane %v353, %v369
          %v371 = vlaneseq
          %v372 = vshrl.u32 %v371, 7
          %v373 = vsub.s32 4, %v372
          %v374 = vrot.slane %v353, %v373
          %v375 = vlaneseq
          %v376 = vshrl.u32 %v375, 7
          %v377 = vsub.s32 5, %v376
          %v378 = vrot.slane %v353, %v377
          %v379 = vlaneseq
          %v380 = vshrl.u32 %v379, 7
          %v381 = vsub.s32 6, %v380
          %v382 = vrot.slane %v353, %v381
          %v383 = vlaneseq
          %v384 = vshrl.u32 %v383, 7
          %v385 = vsub.s32 7, %v384
          %v386 = vrot.slane %v353, %v385
          %v395 = vadd.f32 %v302, %v358
          %v396 = vadd.f32 %v309, %v362
          %v397 = vadd.f32 %v316, %v366
          %v398 = vadd.f32 %v323, %v370
          %v399 = vadd.f32 %v330, %v374
          %v400 = vadd.f32 %v337, %v378
          %v401 = vadd.f32 %v344, %v382
          %v402 = vadd.f32 %v352, %v386
          %v403 = vmax.f32 %v395, 0.0
          %v404 = vmax.f32 %v396, 0.0
          %v405 = vmax.f32 %v397, 0.0
          %v406 = vmax.f32 %v398, 0.0
          %v407 = vmax.f32 %v399, 0.0
          %v408 = vmax.f32 %v400, 0.0
          %v409 = vmax.f32 %v401, 0.0
          %v410 = vmax.f32 %v402, 0.0
          %v411 = vld [vmem:[#allocation7] sm:$0xff]
          %v412 = vld [vmem:[#allocation7 + $0x8] sm:$0xff]
          %v413 = vlaneseq
          %v414 = vshrl.u32 %v413, 7
          %v415 = vsub.s32 0, %v414
          %v416 = vrot.slane %v403, %v415
          %v417 = vlaneseq
          %v418 = vshrl.u32 %v417, 7
          %v419 = vsub.s32 0, %v418
          %v420 = vrot.slane %v404, %v419
          %v421 = vlaneseq
          %v422 = vshrl.u32 %v421, 7
          %v423 = vsub.s32 0, %v422
          %v424 = vrot.slane %v405, %v423
          %v425 = vlaneseq
          %v426 = vshrl.u32 %v425, 7
          %v427 = vsub.s32 0, %v426
          %v428 = vrot.slane %v406, %v427
          %v429 = vlaneseq
          %v430 = vshrl.u32 %v429, 7
          %v431 = vsub.s32 0, %v430
          %v432 = vrot.slane %v407, %v431
          %v433 = vlaneseq
          %v434 = vshrl.u32 %v433, 7
          %v435 = vsub.s32 0, %v434
          %v436 = vrot.slane %v408, %v435
          %v437 = vlaneseq
          %v438 = vshrl.u32 %v437, 7
          %v439 = vsub.s32 0, %v438
          %v440 = vrot.slane %v409, %v439
          %v441 = vlaneseq
          %v442 = vshrl.u32 %v441, 7
          %v443 = vsub.s32 0, %v442
          %v444 = vrot.slane %v410, %v443
          %v447 = vcombine.high %v411, %v411
          %v449 = vunpack.c.l.s4 1983009808
          %v450 = vunpack.c.0.s8 %v449
          %v451 = vlaneseq
          %v452 = vshrl.u32 %v451, 7
          %v453 = vsub.s32 %v450, %v452
          %v454 = vrot.slane %v411, %v453
          %v456 = vunpack.c.l.s4 1983009808
          %v457 = vunpack.c.0.s8 %v456
          %v458 = vlaneseq
          %v459 = vshrl.u32 %v458, 7
          %v460 = vsub.s32 %v457, %v459
          %v461 = vrot.slane %v447, %v460
          %v462 = vcombine.high %v454, %v454
          %v463 = vcombine.high %v461, %v461
          %v464 = vcombine.high %v412, %v412
          %v466 = vunpack.c.l.s4 1983009808
          %v467 = vunpack.c.0.s8 %v466
          %v468 = vlaneseq
          %v469 = vshrl.u32 %v468, 7
          %v470 = vsub.s32 %v467, %v469
          %v471 = vrot.slane %v412, %v470
          %v473 = vunpack.c.l.s4 1983009808
          %v474 = vunpack.c.0.s8 %v473
          %v475 = vlaneseq
          %v476 = vshrl.u32 %v475, 7
          %v477 = vsub.s32 %v474, %v476
          %v478 = vrot.slane %v464, %v477
          %v479 = vcombine.high %v471, %v471
          %v480 = vcombine.high %v478, %v478
          %v489 = vmul.f32 %v416, %v454
          %v490 = vmul.f32 %v420, %v462
          %v491 = vmul.f32 %v424, %v461
          %v492 = vmul.f32 %v428, %v463
          %v493 = vmul.f32 %v432, %v471
          %v494 = vmul.f32 %v436, %v479
          %v495 = vmul.f32 %v440, %v478
          %v496 = vmul.f32 %v444, %v480
          %vm497 = vcmask 1041408
          %v498 = vsel %vm497, %v489, 0.0
          %v499 = vsel %vm497, %v490, 0.0
          %v500 = vadd.f32 %v498, %v499
          %v501 = vsel %vm497, %v491, 0.0
          %v502 = vadd.f32 %v500, %v501
          %v503 = vsel %vm497, %v492, 0.0
          %v504 = vadd.f32 %v502, %v503
          %v505 = vsel %vm497, %v493, 0.0
          %v506 = vadd.f32 %v504, %v505
          %v507 = vsel %vm497, %v494, 0.0
          %v508 = vadd.f32 %v506, %v507
          %v509 = vsel %vm497, %v495, 0.0
          %v510 = vadd.f32 %v508, %v509
          %vm511 = vcmask 844800
          %v512 = vsel %vm511, %v496, 0.0
          %v513 = vadd.f32 %v510, %v512
          %514 = vadd.xlane.f32.xlu0 %v513
          %v515 = vpop.xlane.xlu0 %514
          %v516 = vld [vmem:[%s4] sm:$0x3]
          %v517 = vadd.f32 %v515, %v516
          %vm518 = vcmask 1024
          %519 = vst.msk [vmem:[%s5] sm:$0x3] %vm518, %v517
          %v520 = vld [vmem:[#allocation5] sm:$0x77]
          %v521 = vld [vmem:[#allocation5 + $0x8] sm:$0x77]
          %v522 = vld [vmem:[#allocation5 + $0x10] sm:$0x77]
          %v523 = vld [vmem:[#allocation5 + $0x18] sm:$0x77]
          %v528 = vcombine.high %v520, %v520
          %v529 = vcombine.high %v521, %v521
          %v530 = vcombine.high %v522, %v522
          %v531 = vcombine.high %v523, %v523
          %v532 = vrot.slane %v520, 5
          %v533 = vrot.slane %v528, 5
          %v534 = vrot.slane %v521, 5
          %v535 = vrot.slane %v529, 5
          %v536 = vrot.slane %v522, 5
          %v537 = vrot.slane %v530, 5
          %v538 = vrot.slane %v523, 5
          %v539 = vrot.slane %v531, 5
          %v548 = vmul.f32 %v270, %v532
          %v549 = vmul.f32 %v270, %v533
          %v550 = vmul.f32 %v270, %v534
          %v551 = vmul.f32 %v270, %v535
          %v552 = vmul.f32 %v270, %v536
          %v553 = vmul.f32 %v270, %v537
          %v554 = vmul.f32 %v270, %v538
          %v555 = vmul.f32 %v270, %v539
          %v564 = vrot.slane %v548, 3
          %v565 = vrot.slane %v549, 3
          %v566 = vrot.slane %v550, 3
          %v567 = vrot.slane %v551, 3
          %v568 = vrot.slane %v552, 3
          %v569 = vrot.slane %v553, 3
          %v570 = vrot.slane %v554, 3
          %v571 = vrot.slane %v555, 3
          %v580 = vsel %vm295, %v564, 0.0
          %v581 = vrot.slane %v580, 4
          %v582 = vadd.f32 %v580, %v581
          %v583 = vrot.slane %v582, 2
          %v584 = vadd.f32 %v582, %v583
          %v585 = vrot.slane %v584, 1
          %v586 = vadd.f32 %v584, %v585
          %v587 = vsel %vm295, %v565, 0.0
          %v588 = vrot.slane %v587, 4
          %v589 = vadd.f32 %v587, %v588
          %v590 = vrot.slane %v589, 2
          %v591 = vadd.f32 %v589, %v590
          %v592 = vrot.slane %v591, 1
          %v593 = vadd.f32 %v591, %v592
          %v594 = vsel %vm295, %v566, 0.0
          %v595 = vrot.slane %v594, 4
          %v596 = vadd.f32 %v594, %v595
          %v597 = vrot.slane %v596, 2
          %v598 = vadd.f32 %v596, %v597
          %v599 = vrot.slane %v598, 1
          %v600 = vadd.f32 %v598, %v599
          %v601 = vsel %vm295, %v567, 0.0
          %v602 = vrot.slane %v601, 4
          %v603 = vadd.f32 %v601, %v602
          %v604 = vrot.slane %v603, 2
          %v605 = vadd.f32 %v603, %v604
          %v606 = vrot.slane %v605, 1
          %v607 = vadd.f32 %v605, %v606
          %v608 = vsel %vm295, %v568, 0.0
          %v609 = vrot.slane %v608, 4
          %v610 = vadd.f32 %v608, %v609
          %v611 = vrot.slane %v610, 2
          %v612 = vadd.f32 %v610, %v611
          %v613 = vrot.slane %v612, 1
          %v614 = vadd.f32 %v612, %v613
          %v615 = vsel %vm295, %v569, 0.0
          %v616 = vrot.slane %v615, 4
          %v617 = vadd.f32 %v615, %v616
          %v618 = vrot.slane %v617, 2
          %v619 = vadd.f32 %v617, %v618
          %v620 = vrot.slane %v619, 1
          %v621 = vadd.f32 %v619, %v620
          %v622 = vsel %vm295, %v570, 0.0
          %v623 = vrot.slane %v622, 4
          %v624 = vadd.f32 %v622, %v623
          %v625 = vrot.slane %v624, 2
          %v626 = vadd.f32 %v624, %v625
          %v627 = vrot.slane %v626, 1
          %v628 = vadd.f32 %v626, %v627
          %v629 = vsel %vm345, %v571, 0.0
          %v630 = vrot.slane %v629, 4
          %v631 = vadd.f32 %v629, %v630
          %v632 = vrot.slane %v631, 2
          %v633 = vadd.f32 %v631, %v632
          %v634 = vrot.slane %v633, 1
          %v635 = vadd.f32 %v633, %v634
          %v636 = vld [vmem:[%s2] sm:$0xff]
          %v638 = vlaneseq
          %v639 = vshrl.u32 %v638, 7
          %v640 = vsub.s32 0, %v639
          %v641 = vrot.slane %v636, %v640
          %v642 = vlaneseq
          %v643 = vshrl.u32 %v642, 7
          %v644 = vsub.s32 1, %v643
          %v645 = vrot.slane %v636, %v644
          %v646 = vlaneseq
          %v647 = vshrl.u32 %v646, 7
          %v648 = vsub.s32 2, %v647
          %v649 = vrot.slane %v636, %v648
          %v650 = vlaneseq
          %v651 = vshrl.u32 %v650, 7
          %v652 = vsub.s32 3, %v651
          %v653 = vrot.slane %v636, %v652
          %v654 = vlaneseq
          %v655 = vshrl.u32 %v654, 7
          %v656 = vsub.s32 4, %v655
          %v657 = vrot.slane %v636, %v656
          %v658 = vlaneseq
          %v659 = vshrl.u32 %v658, 7
          %v660 = vsub.s32 5, %v659
          %v661 = vrot.slane %v636, %v660
          %v662 = vlaneseq
          %v663 = vshrl.u32 %v662, 7
          %v664 = vsub.s32 6, %v663
          %v665 = vrot.slane %v636, %v664
          %v666 = vlaneseq
          %v667 = vshrl.u32 %v666, 7
          %v668 = vsub.s32 7, %v667
          %v669 = vrot.slane %v636, %v668
          %v678 = vadd.f32 %v586, %v641
          %v679 = vadd.f32 %v593, %v645
          %v680 = vadd.f32 %v600, %v649
          %v681 = vadd.f32 %v607, %v653
          %v682 = vadd.f32 %v614, %v657
          %v683 = vadd.f32 %v621, %v661
          %v684 = vadd.f32 %v628, %v665
          %v685 = vadd.f32 %v635, %v669
          %v686 = vmax.f32 %v678, 0.0
          %v687 = vmax.f32 %v679, 0.0
          %v688 = vmax.f32 %v680, 0.0
          %v689 = vmax.f32 %v681, 0.0
          %v690 = vmax.f32 %v682, 0.0
          %v691 = vmax.f32 %v683, 0.0
          %v692 = vmax.f32 %v684, 0.0
          %v693 = vmax.f32 %v685, 0.0
          %v694 = vld [vmem:[#allocation7] sm:$0xff]
          %v695 = vld [vmem:[#allocation7 + $0x8] sm:$0xff]
          %v696 = vlaneseq
          %v697 = vshrl.u32 %v696, 7
          %v698 = vsub.s32 0, %v697
          %v699 = vrot.slane %v686, %v698
          %v700 = vlaneseq
          %v701 = vshrl.u32 %v700, 7
          %v702 = vsub.s32 0, %v701
          %v703 = vrot.slane %v687, %v702
          %v704 = vlaneseq
          %v705 = vshrl.u32 %v704, 7
          %v706 = vsub.s32 0, %v705
          %v707 = vrot.slane %v688, %v706
          %v708 = vlaneseq
          %v709 = vshrl.u32 %v708, 7
          %v710 = vsub.s32 0, %v709
          %v711 = vrot.slane %v689, %v710
          %v712 = vlaneseq
          %v713 = vshrl.u32 %v712, 7
          %v714 = vsub.s32 0, %v713
          %v715 = vrot.slane %v690, %v714
          %v716 = vlaneseq
          %v717 = vshrl.u32 %v716, 7
          %v718 = vsub.s32 0, %v717
          %v719 = vrot.slane %v691, %v718
          %v720 = vlaneseq
          %v721 = vshrl.u32 %v720, 7
          %v722 = vsub.s32 0, %v721
          %v723 = vrot.slane %v692, %v722
          %v724 = vlaneseq
          %v725 = vshrl.u32 %v724, 7
          %v726 = vsub.s32 0, %v725
          %v727 = vrot.slane %v693, %v726
          %v730 = vcombine.high %v694, %v694
          %v732 = vunpack.c.l.s4 1983009808
          %v733 = vunpack.c.0.s8 %v732
          %v734 = vlaneseq
          %v735 = vshrl.u32 %v734, 7
          %v736 = vsub.s32 %v733, %v735
          %v737 = vrot.slane %v694, %v736
          %v739 = vunpack.c.l.s4 1983009808
          %v740 = vunpack.c.0.s8 %v739
          %v741 = vlaneseq
          %v742 = vshrl.u32 %v741, 7
          %v743 = vsub.s32 %v740, %v742
          %v744 = vrot.slane %v730, %v743
          %v745 = vcombine.high %v737, %v737
          %v746 = vcombine.high %v744, %v744
          %v747 = vcombine.high %v695, %v695
          %v749 = vunpack.c.l.s4 1983009808
          %v750 = vunpack.c.0.s8 %v749
          %v751 = vlaneseq
          %v752 = vshrl.u32 %v751, 7
          %v753 = vsub.s32 %v750, %v752
          %v754 = vrot.slane %v695, %v753
          %v756 = vunpack.c.l.s4 1983009808
          %v757 = vunpack.c.0.s8 %v756
          %v758 = vlaneseq
          %v759 = vshrl.u32 %v758, 7
          %v760 = vsub.s32 %v757, %v759
          %v761 = vrot.slane %v747, %v760
          %v762 = vcombine.high %v754, %v754
          %v763 = vcombine.high %v761, %v761
          %v772 = vmul.f32 %v699, %v737
          %v773 = vmul.f32 %v703, %v745
          %v774 = vmul.f32 %v707, %v744
          %v775 = vmul.f32 %v711, %v746
          %v776 = vmul.f32 %v715, %v754
          %v777 = vmul.f32 %v719, %v762
          %v778 = vmul.f32 %v723, %v761
          %v779 = vmul.f32 %v727, %v763
          %v780 = vsel %vm497, %v772, 0.0
          %v781 = vsel %vm497, %v773, 0.0
          %v782 = vadd.f32 %v780, %v781
          %v783 = vsel %vm497, %v774, 0.0
          %v784 = vadd.f32 %v782, %v783
          %v785 = vsel %vm497, %v775, 0.0
          %v786 = vadd.f32 %v784, %v785
          %v787 = vsel %vm497, %v776, 0.0
          %v788 = vadd.f32 %v786, %v787
          %v789 = vsel %vm497, %v777, 0.0
          %v790 = vadd.f32 %v788, %v789
          %v791 = vsel %vm497, %v778, 0.0
          %v792 = vadd.f32 %v790, %v791
          %v793 = vsel %vm511, %v779, 0.0
          %v794 = vadd.f32 %v792, %v793
          %795 = vadd.xlane.f32.xlu0 %v794
          %v796 = vpop.xlane.xlu0 %795
          %v797 = vld [vmem:[%s4] sm:$0x3]
          %v798 = vadd.f32 %v796, %v797
          %s799 = scalar_lea.vmem %s5, 2
          %800 = vst.msk [vmem:[%s799] sm:$0x3] %vm518, %v798
        $region60: #{tpu_custom_call.1} parent=39 // pred_fallthru
          _
        // Predicated region
        $region61: #{tpu_custom_call.1} parent=39 // pred_check
          %p801 = pneg %p143
        $region62: #{tpu_custom_call.1} parent=39 // pred_check_branch
          %803 = sbr.rel (%p801) target = $region64
        $region63: #{tpu_custom_call.1} parent=39 // pred_region
          _
        $region64: #{tpu_custom_call.1} parent=39 // pred_fallthru
          _
        // Predicated region
        $region65: #{tpu_custom_call.1} parent=39 // pred_check
          %p804 = pneg %p143
        $region66: #{tpu_custom_call.1} parent=39 // pred_check_branch
          %806 = sbr.rel (%p804) target = $region68
        $region67: #{tpu_custom_call.1} parent=39 // pred_region
          _
        $region68: #{tpu_custom_call.1} parent=39 // pred_fallthru
          _
      $region40: #{tpu_custom_call.1} parent=5 // pred_fallthru
        _
      %p807 = scmp.le.s32.totalorder 2, %s15
      // Predicated region
      $region69: #{tpu_custom_call.1} parent=5 // pred_check
        %p808 = pneg %p807
      $region70: #{tpu_custom_call.1} parent=5 // pred_check_branch
        %810 = sbr.rel (%p808) target = $region72
      $region71: #{tpu_custom_call.1} parent=5 // pred_region
        %s811 = ssub.s32 %s15, 2
      $region72: #{tpu_custom_call.1} parent=5 // pred_fallthru
        _
    $region6: #{tpu_custom_call.1} parent=1 // loop_footer
      %s19 = sadd.s32 1, %s15
    $region7: #{tpu_custom_call.1} parent=1 // loop_footer_branch
      %14 = sbr.rel target = $region3
    $region8: #{tpu_custom_call.1} parent=1 // loop_exit
      _
    %812 = vsyncpa [#allocation4], 1
    %s813 = scalar_lea.sflag [#allocation4], 1
    %814 = vsyncpa %s813, 1
    %815 = vsyncpa [#allocation6], 1

</llo_original>
